<compile_context>
chip_gen: v7x
topology: tpu7x:2x2x1
jax: 0.10.0
libtpu: 0.0.40
codegen_flags: <defaults>
</compile_context>

<pallas_src>
import functools

import jax
import jax.numpy as jnp
from jax.experimental import pallas as pl
from jax.experimental.pallas import tpu as pltpu


# ----------------------------- Pallas kernel ------------------------------- #

def _grouped_expert_kernel(tile_expert_ref,   # scalar prefetch: (num_m_tiles,) i32
                           x_ref,             # (tile_m, tile_k)    bf16 grouped tokens
                           w_ref,             # (1, tile_k, tile_n) bf16 expert weight
                           b_ref,             # (1, 1, tile_n)      f32  expert bias
                           s_ref,             # (tile_m, 1)         f32  gate scores
                           o_ref,             # (tile_m, tile_n)    f32  weighted rows
                           acc_ref):          # VMEM (tile_m, tile_n) f32 accumulator
    del tile_expert_ref  # consumed by the index_maps only
    k = pl.program_id(2)

    @pl.when(k == 0)
    def _():
        # y = x @ W_e + b_e : seed the accumulator with the expert bias.
        acc_ref[...] = jnp.broadcast_to(b_ref[0], acc_ref.shape)

    # bf16 operands on the MXU, f32 accumulation.
    acc_ref[...] += jnp.dot(x_ref[...], w_ref[0],
                            preferred_element_type=jnp.float32)

    @pl.when(k == pl.num_programs(2) - 1)
    def _():
        # "bmm" combine step: scale each routed row by its gate score.
        # Padding rows have score 0 and contribute nothing downstream.
        o_ref[...] = acc_ref[...] * s_ref[...]


# ------------------------------- wrappers ----------------------------------- #

def grouped_moe_combine(tile_expert, x_grouped, scores_grouped,
                        w_experts, b_experts, *, tile_m, tile_n, tile_k):
    """Grouped GEMM: every M-tile of x_grouped belongs to one expert
    (tile_expert[m]); computes score[r] * (x[r] @ W_e + b_e) per routed row."""
    P, D = x_grouped.shape
    E = w_experts.shape[0]
    assert P % tile_m == 0 and D % tile_n == 0 and D % tile_k == 0
    assert tile_m % 8 == 0 and tile_n % 128 == 0 and tile_k % 128 == 0
    num_m, num_n, num_k = P // tile_m, D // tile_n, D // tile_k

    grid_spec = pltpu.PrefetchScalarGridSpec(
        num_scalar_prefetch=1,
        grid=(num_m, num_n, num_k),
        in_specs=[
            # grouped tokens
            pl.BlockSpec((tile_m, tile_k), lambda m, n, k, te: (m, k)),
            # expert weight tile, expert chosen per M-tile via scalar prefetch
            pl.BlockSpec((1, tile_k, tile_n), lambda m, n, k, te: (te[m], k, n)),
            # expert bias tile
            pl.BlockSpec((1, 1, tile_n), lambda m, n, k, te: (te[m], 0, n)),
            # per-row combine (gate) weights
            pl.BlockSpec((tile_m, 1), lambda m, n, k, te: (m, 0)),
        ],
        out_specs=pl.BlockSpec((tile_m, tile_n), lambda m, n, k, te: (m, n)),
        scratch_shapes=[pltpu.VMEM((tile_m, tile_n), jnp.float32)],
    )
    return pl.pallas_call(
        _grouped_expert_kernel,
        out_shape=jax.ShapeDtypeStruct((P, D), jnp.float32),
        grid_spec=grid_spec,
        compiler_params=pltpu.CompilerParams(
            dimension_semantics=("parallel", "parallel", "arbitrary")),
    )(tile_expert, x_grouped, w_experts, b_experts.reshape(E, 1, D),
      scores_grouped)


@functools.partial(jax.jit, static_argnames=("top_k", "tile_m", "tile_n", "tile_k"))
def fmoe_forward(x, params, top_k, *, tile_m=256, tile_n=512, tile_k=512):
    """Full FMoE.forward for world_size=1 / slice_size=1 / no mask."""
    B, D = x.shape
    E = params["w_experts"].shape[0]
    tile_n = min(tile_n, D)
    tile_k = min(tile_k, D)

    # ---------------- NaiveGate (tiny matmul -> plain XLA) -------------------
    logits = x.astype(jnp.float32) @ params["wg_t"].astype(jnp.float32) + params["bg"]
    top_vals, gate_top_k_idx = jax.lax.top_k(logits, top_k)            # (B, k)
    gate_score = jax.nn.softmax(top_vals, axis=-1).astype(jnp.float32) # (B, k)
    gate_top_k_idx = gate_top_k_idx.astype(jnp.int32)

    # ---------------- routing metadata (the MOEScatter step) -----------------
    R = B * top_k                                   # number of routed rows
    flat_expert = gate_top_k_idx.reshape(-1)                              # (R,)
    flat_token = jnp.arange(R, dtype=jnp.int32) // top_k                  # (R,)
    flat_score = gate_score.reshape(-1)                                   # (R,)

    order = jnp.argsort(flat_expert)                # sort routed rows by expert
    sorted_expert = flat_expert[order]
    sorted_token = flat_token[order]
    sorted_score = flat_score[order]

    counts = jnp.bincount(flat_expert, length=E)                          # (E,)
    padded_counts = ((counts + tile_m - 1) // tile_m) * tile_m
    group_end = jnp.cumsum(padded_counts)           # padded group ends
    padded_off = group_end - padded_counts          # padded group starts
    src_off = jnp.cumsum(counts) - counts           # unpadded group starts

    within = jnp.arange(R, dtype=jnp.int32) - src_off[sorted_expert].astype(jnp.int32)
    dest_row = padded_off[sorted_expert].astype(jnp.int32) + within       # (R,)

    # Static worst-case padded capacity (each expert adds < tile_m padding rows).
    num_m_tiles = -(-(R + E * (tile_m - 1)) // tile_m)
    P = num_m_tiles * tile_m

    x_bf16 = x.astype(jnp.bfloat16)
    x_grouped = jnp.zeros((P, D), jnp.bfloat16).at[dest_row].set(x_bf16[sorted_token])
    scores_grouped = jnp.zeros((P, 1), jnp.float32).at[dest_row].set(sorted_score[:, None])
    seg_ids = jnp.full((P,), B, dtype=jnp.int32).at[dest_row].set(sorted_token)

    # Expert id of every M-tile (tiles past the real padded total are harmless:
    # all-zero rows with score 0).
    tile_start = jnp.arange(num_m_tiles, dtype=jnp.int32) * tile_m
    tile_expert = jnp.clip(
        jnp.searchsorted(group_end, tile_start, side="right"), 0, E - 1
    ).astype(jnp.int32)

    # ---------------- grouped expert GEMM + in-kernel score combine ----------
    y_rows = grouped_moe_combine(
        tile_expert, x_grouped, scores_grouped,
        params["w_experts"], params["b_experts"],
        tile_m=tile_m, tile_n=tile_n, tile_k=tile_k)                      # (P, D)

    # ---------------- MOEGather + bmm: sum the top_k rows of each token ------
    moe_out = jax.ops.segment_sum(y_rows, seg_ids, num_segments=B + 1)[:B]
    return moe_out, gate_top_k_idx


# --------------------------------- main ------------------------------------- #

if __name__ == "__main__":
    B, D, E, TOP_K = 16, 256, 4, 2      # tokens, d_model, num_expert, top_k
    TILE_M, TILE_N, TILE_K = 32, 128, 128

    key = jax.random.PRNGKey(0)
    kx, kg, kgb, kw, kb = jax.random.split(key, 5)

    x = jax.random.normal(kx, (B, D), dtype=jnp.float32)

    params = {
        # NaiveGate linear: weight (E, D) stored transposed -> (D, E), bias (E,)
        "wg_t": jax.random.normal(kg, (D, E), dtype=jnp.float32) * 0.05,
        "bg": jax.random.normal(kgb, (E,), dtype=jnp.float32) * 0.05,
        # per-expert nn.Linear(d_model, d_model): weight pre-transposed, bf16
        "w_experts": (jax.random.normal(kw, (E, D, D), dtype=jnp.float32) * 0.05
                      ).astype(jnp.bfloat16),
        "b_experts": jax.random.normal(kb, (E, D), dtype=jnp.float32) * 0.05,
    }

    moe_out, gate_idx = fmoe_forward(x, params, TOP_K,
                                     tile_m=TILE_M, tile_n=TILE_N, tile_k=TILE_K)
    jax.block_until_ready(moe_out)
    jax.block_until_ready(gate_idx)

    # --- pure-JAX reference (scatter/expert/gather/bmm, dense-equivalent) ---
    logits_ref = x @ params["wg_t"] + params["bg"]
    vals_ref, idx_ref = jax.lax.top_k(logits_ref, TOP_K)
    score_ref = jax.nn.softmax(vals_ref, axis=-1)
    y_all = jnp.einsum("bd,edh->beh", x.astype(jnp.bfloat16), params["w_experts"],
                       preferred_element_type=jnp.float32) + params["b_experts"][None]
    y_sel = jnp.take_along_axis(y_all, idx_ref[:, :, None], axis=1)      # (B, k, D)
    out_ref = jnp.einsum("bk,bkd->bd", score_ref, y_sel)

    assert jnp.array_equal(gate_idx, idx_ref.astype(jnp.int32))
    assert jnp.allclose(moe_out, out_ref, atol=1e-3, rtol=1e-3)

    print("KERNEL_OK")
</pallas_src>

<mosaic_0001>
module attributes {stable_mosaic.version = 11 : i64} {
  func.func private @main(%arg0: i32) attributes {dimension_semantics = [#tpu.dimension_semantics<core_parallel>], iteration_bounds = array<i64: 2>, tpu.core_type = #tpu.core_type<sc_scalar_subcore>, window_params = []} {
    return
  }
}

module attributes {stable_mosaic.version = 11 : i64} {
  func.func private @main(%arg0: i32) attributes {dimension_semantics = [#tpu.dimension_semantics<core_parallel>], iteration_bounds = array<i64: 2>, tpu.core_type = #tpu.core_type<sc_scalar_subcore>, window_params = []} {
    return
  }
}

module attributes {stable_mosaic.version = 11 : i64} {
  func.func @_grouped_expert_kernel(%arg0: i32, %arg1: i32, %arg2: i32, %arg3: memref<5xi32, #tpu.memory_space<smem>>, %arg4: memref<32x128xbf16, #tpu.memory_space<vmem>>, %arg5: memref<1x128x128xbf16, #tpu.memory_space<vmem>>, %arg6: memref<1x1x128xf32, #tpu.memory_space<vmem>>, %arg7: memref<32x1xf32, #tpu.memory_space<vmem>>, %arg8: memref<32x128xf32, #tpu.memory_space<vmem>>, %arg9: memref<32x128xf32, #tpu.memory_space<vmem>>) attributes {dimension_semantics = [#tpu.dimension_semantics<parallel>, #tpu.dimension_semantics<parallel>, #tpu.dimension_semantics<arbitrary>], iteration_bounds = array<i64: 5, 2, 2>, scalar_prefetch = 1 : i64, scratch_operands = 1 : i64, tpu.core_type = #tpu.core_type<tc>, window_params = [{transform_indices = @transform_0, window_bounds = array<i64: 32, 128>}, {transform_indices = @transform_1, window_bounds = array<i64: 1, 128, 128>}, {transform_indices = @transform_2, window_bounds = array<i64: 1, 1, 128>}, {transform_indices = @transform_3, window_bounds = array<i64: 32, 1>}, {transform_indices = @transform_4, window_bounds = array<i64: 32, 128>}]} {
    %c0_i32 = arith.constant 0 : i32
    %0 = arith.cmpi eq, %arg2, %c0_i32 : i32
    %1 = arith.extui %0 : i1 to i32
    %c0_i32_0 = arith.constant 0 : i32
    %2 = arith.cmpi ne, %1, %c0_i32_0 : i32
    scf.if %2 {
      %c0_10 = arith.constant 0 : index
      %c0_11 = arith.constant 0 : index
      %c0_12 = arith.constant 0 : index
      %13 = vector.load %arg6[%c0_10, %c0_11, %c0_12] : memref<1x1x128xf32, #tpu.memory_space<vmem>>, vector<1x1x128xf32>
      %14 = vector.shape_cast %13 : vector<1x1x128xf32> to vector<1x128xf32>
      %15 = vector.shape_cast %14 : vector<1x128xf32> to vector<1x128xf32>
      %16 = vector.broadcast %15 : vector<1x128xf32> to vector<32x128xf32>
      %c0_13 = arith.constant 0 : index
      %c0_14 = arith.constant 0 : index
      %17 = vector.load %arg9[%c0_13, %c0_14] : memref<32x128xf32, #tpu.memory_space<vmem>>, vector<32x128xf32>
      tpu.vector_store %arg9[%c0_13, %c0_14], %16 {strides = array<i32>} : memref<32x128xf32, #tpu.memory_space<vmem>>, vector<32x128xf32>,
    } else {
    }
    %c0 = arith.constant 0 : index
    %c0_1 = arith.constant 0 : index
    %3 = vector.load %arg9[%c0, %c0_1] : memref<32x128xf32, #tpu.memory_space<vmem>>, vector<32x128xf32>
    %c0_2 = arith.constant 0 : index
    %c0_3 = arith.constant 0 : index
    %4 = vector.load %arg4[%c0_2, %c0_3] : memref<32x128xbf16, #tpu.memory_space<vmem>>, vector<32x128xbf16>
    %c0_4 = arith.constant 0 : index
    %c0_5 = arith.constant 0 : index
    %c0_6 = arith.constant 0 : index
    %5 = vector.load %arg5[%c0_4, %c0_5, %c0_6] : memref<1x128x128xbf16, #tpu.memory_space<vmem>>, vector<1x128x128xbf16>
    %6 = vector.shape_cast %5 : vector<1x128x128xbf16> to vector<128x128xbf16>
    %cst = arith.constant dense<0.000000e+00> : vector<32x128xf32>
    %7 = tpu.matmul %4, %6, %cst {dimension_numbers = #tpu.dot_dimension_numbers<[1], [0], [0], [1], [0, 0, 1, 1], [], []>} : vector<32x128xbf16>, vector<128x128xbf16>, vector<32x128xf32> -> vector<32x128xf32>
    %8 = arith.addf %3, %7 : vector<32x128xf32>
    %c0_7 = arith.constant 0 : index
    %c0_8 = arith.constant 0 : index
    %9 = vector.load %arg9[%c0_7, %c0_8] : memref<32x128xf32, #tpu.memory_space<vmem>>, vector<32x128xf32>
    tpu.vector_store %arg9[%c0_7, %c0_8], %8 {strides = array<i32>} : memref<32x128xf32, #tpu.memory_space<vmem>>, vector<32x128xf32>,
    %c1_i32 = arith.constant 1 : i32
    %10 = arith.cmpi eq, %arg2, %c1_i32 : i32
    %11 = arith.extui %10 : i1 to i32
    %c0_i32_9 = arith.constant 0 : i32
    %12 = arith.cmpi ne, %11, %c0_i32_9 : i32
    scf.if %12 {
      %c0_10 = arith.constant 0 : index
      %c0_11 = arith.constant 0 : index
      %13 = vector.load %arg9[%c0_10, %c0_11] : memref<32x128xf32, #tpu.memory_space<vmem>>, vector<32x128xf32>
      %c0_12 = arith.constant 0 : index
      %c0_13 = arith.constant 0 : index
      %14 = vector.load %arg7[%c0_12, %c0_13] : memref<32x1xf32, #tpu.memory_space<vmem>>, vector<32x1xf32>
      %15 = vector.broadcast %14 : vector<32x1xf32> to vector<32x128xf32>
      %16 = arith.mulf %13, %15 : vector<32x128xf32>
      %c0_14 = arith.constant 0 : index
      %c0_15 = arith.constant 0 : index
      %17 = vector.load %arg8[%c0_14, %c0_15] : memref<32x128xf32, #tpu.memory_space<vmem>>, vector<32x128xf32>
      tpu.vector_store %arg8[%c0_14, %c0_15], %16 {strides = array<i32>} : memref<32x128xf32, #tpu.memory_space<vmem>>, vector<32x128xf32>,
    } else {
    }
    return
  }
  func.func @transform_0(%arg0: i32, %arg1: i32, %arg2: i32, %arg3: memref<5xi32, #tpu.memory_space<smem>>) -> (i32, i32) {
    %c0_i32 = arith.constant 0 : i32
    return %arg0, %arg2 : i32, i32
  }
  func.func @transform_1(%arg0: i32, %arg1: i32, %arg2: i32, %arg3: memref<5xi32, #tpu.memory_space<smem>>) -> (i32, i32, i32) {
    %0 = arith.index_cast %arg0 : i32 to index
    %1 = memref.load %arg3[%0] : memref<5xi32, #tpu.memory_space<smem>>
    %c0_i32 = arith.constant 0 : i32
    return %1, %arg2, %arg1 : i32, i32, i32
  }
  func.func @transform_2(%arg0: i32, %arg1: i32, %arg2: i32, %arg3: memref<5xi32, #tpu.memory_space<smem>>) -> (i32, i32, i32) {
    %0 = arith.index_cast %arg0 : i32 to index
    %1 = memref.load %arg3[%0] : memref<5xi32, #tpu.memory_space<smem>>
    %c0_i32 = arith.constant 0 : i32
    %c0_i32_0 = arith.constant 0 : i32
    return %1, %c0_i32, %arg1 : i32, i32, i32
  }
  func.func @transform_3(%arg0: i32, %arg1: i32, %arg2: i32, %arg3: memref<5xi32, #tpu.memory_space<smem>>) -> (i32, i32) {
    %c0_i32 = arith.constant 0 : i32
    %c0_i32_0 = arith.constant 0 : i32
    return %arg0, %c0_i32 : i32, i32
  }
  func.func @transform_4(%arg0: i32, %arg1: i32, %arg2: i32, %arg3: memref<5xi32, #tpu.memory_space<smem>>) -> (i32, i32) {
    %c0_i32 = arith.constant 0 : i32
    return %arg0, %arg1 : i32, i32
  }
}

</mosaic_0001>

<llo_original>
// kernel: custom-call.1
$region0: #{custom-call.1}
  %s0 = inlined_call_operand.vmem [shape: u32[5], index: 0, kind: output, shape index: {}]

// kernel: fmoe_forward.1
$region0: #{fmoe_forward.1}
  #allocation0 [shape = 'u32[]', space=smem, size = 0x4, offset = 0x4, fixed_abs, tag = 'smem constant byte address 0x4 - core index']
  #allocation1 [shape = 'u32[144,128]{1,0:T(1,128)}', space=vmem, size = 0x12000, scoped, tag = 'internal scratch']
  #allocation2 [shape = 'f32[32,128]{1,0:T(8,128)}', space=vmem, size = 0x4000, scoped, tag = 'scratch operand']
  #allocation3 [shape = 's32[1]{0}', space=sflag, size = 0x4, scoped, tag = 'scoped memory for fmoe_forward.1']
  #allocation4 [shape = 'u8[512]{0}', space=smem, size = 0x200, scoped, tag = 'prefetched SMEM operand 0']
  %s0 = inlined_call_operand.vmem [shape: s32[5], index: 0, kind: input, shape index: {}]
  %s1 = inlined_call_operand.vmem [shape: bf16[160,256], index: 1, kind: input, shape index: {}]
  %s2 = inlined_call_operand.vmem [shape: bf16[4,256,256], index: 2, kind: input, shape index: {}]
  %s3 = inlined_call_operand.vmem [shape: f32[4,1,256], index: 3, kind: input, shape index: {}]
  %s4 = inlined_call_operand.vmem [shape: f32[160,1], index: 4, kind: input, shape index: {}]
  %s5 = inlined_call_operand.vmem [shape: f32[160,256], index: 5, kind: output, shape index: {}]
  %s6 = sld [smem:[#allocation0]]
  $region173: #{fmoe_forward.1} parent=0
    _
  %s8 = ssub.s32 1, %s6
  %s9 = scalar_select 0, %s8, %s6
  %s10 = sshll.u32 %s0, 4
  %s11 = int_to_ptr.vmem [resolvable:$true] %s10
  %13 = dma.vmem_to_smem %s11, 16, [#allocation4], [#allocation3]
  %14 = dma.done [#allocation3], 16
  %15 = sfence
  $region1: #{fmoe_forward.1} parent=0
    #allocation5 [shape = 'u8[16384]{0}', space=vmem, size = 0x4000, scoped, tag = 'input window, operand 1']
    #allocation6 [shape = 'u8[65536]{0}', space=vmem, size = 0x10000, scoped, tag = 'input window, operand 2']
    #allocation7 [shape = 'u8[32768]{0}', space=vmem, size = 0x8000, scoped, tag = 'output window, operand 0']
    loop: start=0, step=1, limit=22
    $region2: #{fmoe_forward.1} parent=1 // loop_pre_header
      _
    $region3: #{fmoe_forward.1} parent=1 // loop_header
      %s17 = sphi 0, %s21
      %p18 = scmp.ge.s32.totalorder %s17, 22
      %s24 = sphi 0, %s43
      %s25 = sphi 0, %s39
      %s26 = sphi 0, %s35
      %s27 = sphi 0, %s24
      %s28 = sphi 0, %s25
      %s29 = sphi 0, %s26
      %s30 = sphi 0, %s27
      %s31 = sphi 0, %s28
      %s32 = sphi 0, %s29
      %s48 = sphi 0, %s50
      %s51 = sphi 0, %s48
      %s52 = sphi 0, %s51
      %s68 = sphi 0, %s52
      %s80 = sphi 0, %s82
      %s83 = sphi 0, %s80
      %s84 = sphi 0, %s83
      %s100 = sphi 0, %s84
      %s110 = sphi 0, %s112
      %s113 = sphi 0, %s110
      %s114 = sphi 0, %s113
      %s130 = sphi 0, %s114
      %s136 = sphi 0, %s138
      %s139 = sphi 0, %s136
      %s140 = sphi 0, %s139
      %s156 = sphi 0, %s140
      %s164 = sphi 0, %s166
      %s167 = sphi 0, %s164
      %s168 = sphi 0, %s167
      %s184 = sphi 0, %s168
    $region4: #{fmoe_forward.1} parent=1 // loop_header_branch
      %20 = sbr.rel (%p18) target = $region8
    $region5: #{fmoe_forward.1} parent=1 // loop_body
      %s22 = ssub.s32 %s17, 1
      %s23 = ssub.s32 %s17, 2
      %s33 = sadd.s32 1, %s26
      %p34 = scmp.ge.s32.totalorder %s33, 2
      %s35 = scalar_select %p34, 0, %s33
      %s36 = sadd.s32 1, %s25
      %s37 = scalar_select %p34, %s36, %s25
      %p38 = scmp.ge.s32.totalorder %s37, 2
      %s39 = scalar_select %p38, 0, %s37
      %s40 = sadd.s32 1, %s24
      %s41 = scalar_select %p38, %s40, %s24
      %p42 = scmp.ge.s32.totalorder %s41, 5
      %s43 = scalar_select %p42, 0, %s41
      %s44 = ssub.s32 %s24, %s43
      %s45 = ssub.s32 %s26, %s35
      %s46 = sor.u32 %s44, %s45
      %p47 = scmp.eq.s32.totalorder %s46, 0
      %s49 = sadd.s32 %s48, 1
      %s50 = scalar_select %p47, %s48, %s49
      %p53 = pneg %p47
      %p54 = scmp.eq.s32.totalorder %s17, 19
      %p55 = por %p53, %p54
      %p56 = scmp.ne.s32.totalorder %s48, %s51
      %p57 = scmp.eq.s32.totalorder %s17, 0
      %p58 = por %p56, %p57
      %p59 = scmp.ne.s32.totalorder %s48, %s51
      %p60 = scmp.eq.s32.totalorder %s22, 19
      %p61 = por %p59, %p60
      %p62 = scmp.ne.s32.totalorder %s51, %s52
      %p63 = scmp.eq.s32.totalorder %s22, 0
      %p64 = por %p62, %p63
      %p65 = scmp.ne.s32.totalorder %s51, %s52
      %p66 = scmp.eq.s32.totalorder %s23, 19
      %p67 = por %p65, %p66
      %p69 = scmp.ne.s32.totalorder %s52, %s68
      %p70 = scmp.eq.s32.totalorder %s23, 0
      %p71 = por %p69, %p70
      %s72 = sld [smem:[#allocation4 + %s24]]
      %s73 = sld [smem:[#allocation4 + %s43]]
      %s74 = ssub.s32 %s72, %s73
      %s75 = ssub.s32 %s26, %s35
      %s76 = sor.u32 %s74, %s75
      %s77 = ssub.s32 %s25, %s39
      %s78 = sor.u32 %s76, %s77
      %p79 = scmp.eq.s32.totalorder %s78, 0
      %s81 = sadd.s32 %s80, 1
      %s82 = scalar_select %p79, %s80, %s81
      %p85 = pneg %p79
      %p86 = scmp.eq.s32.totalorder %s17, 19
      %p87 = por %p85, %p86
      %p88 = scmp.ne.s32.totalorder %s80, %s83
      %p89 = scmp.eq.s32.totalorder %s17, 0
      %p90 = por %p88, %p89
      %p91 = scmp.ne.s32.totalorder %s80, %s83
      %p92 = scmp.eq.s32.totalorder %s22, 19
      %p93 = por %p91, %p92
      %p94 = scmp.ne.s32.totalorder %s83, %s84
      %p95 = scmp.eq.s32.totalorder %s22, 0
      %p96 = por %p94, %p95
      %p97 = scmp.ne.s32.totalorder %s83, %s84
      %p98 = scmp.eq.s32.totalorder %s23, 19
      %p99 = por %p97, %p98
      %p101 = scmp.ne.s32.totalorder %s84, %s100
      %p102 = scmp.eq.s32.totalorder %s23, 0
      %p103 = por %p101, %p102
      %s104 = sld [smem:[#allocation4 + %s24]]
      %s105 = sld [smem:[#allocation4 + %s43]]
      %s106 = ssub.s32 %s104, %s105
      %s107 = ssub.s32 %s25, %s39
      %s108 = sor.u32 %s106, %s107
      %p109 = scmp.eq.s32.totalorder %s108, 0
      %s111 = sadd.s32 %s110, 1
      %s112 = scalar_select %p109, %s110, %s111
      %p115 = pneg %p109
      %p116 = scmp.eq.s32.totalorder %s17, 19
      %p117 = por %p115, %p116
      %p118 = scmp.ne.s32.totalorder %s110, %s113
      %p119 = scmp.eq.s32.totalorder %s17, 0
      %p120 = por %p118, %p119
      %p121 = scmp.ne.s32.totalorder %s110, %s113
      %p122 = scmp.eq.s32.totalorder %s22, 19
      %p123 = por %p121, %p122
      %p124 = scmp.ne.s32.totalorder %s113, %s114
      %p125 = scmp.eq.s32.totalorder %s22, 0
      %p126 = por %p124, %p125
      %p127 = scmp.ne.s32.totalorder %s113, %s114
      %p128 = scmp.eq.s32.totalorder %s23, 19
      %p129 = por %p127, %p128
      %p131 = scmp.ne.s32.totalorder %s114, %s130
      %p132 = scmp.eq.s32.totalorder %s23, 0
      %p133 = por %p131, %p132
      %s134 = ssub.s32 %s24, %s43
      %p135 = scmp.eq.s32.totalorder %s134, 0
      %s137 = sadd.s32 %s136, 1
      %s138 = scalar_select %p135, %s136, %s137
      %p141 = pneg %p135
      %p142 = scmp.eq.s32.totalorder %s17, 19
      %p143 = por %p141, %p142
      %p144 = scmp.ne.s32.totalorder %s136, %s139
      %p145 = scmp.eq.s32.totalorder %s17, 0
      %p146 = por %p144, %p145
      %p147 = scmp.ne.s32.totalorder %s136, %s139
      %p148 = scmp.eq.s32.totalorder %s22, 19
      %p149 = por %p147, %p148
      %p150 = scmp.ne.s32.totalorder %s139, %s140
      %p151 = scmp.eq.s32.totalorder %s22, 0
      %p152 = por %p150, %p151
      %p153 = scmp.ne.s32.totalorder %s139, %s140
      %p154 = scmp.eq.s32.totalorder %s23, 19
      %p155 = por %p153, %p154
      %p157 = scmp.ne.s32.totalorder %s140, %s156
      %p158 = scmp.eq.s32.totalorder %s23, 0
      %p159 = por %p157, %p158
      %s160 = ssub.s32 %s24, %s43
      %s161 = ssub.s32 %s25, %s39
      %s162 = sor.u32 %s160, %s161
      %p163 = scmp.eq.s32.totalorder %s162, 0
      %s165 = sadd.s32 %s164, 1
      %s166 = scalar_select %p163, %s164, %s165
      %p169 = pneg %p163
      %p170 = scmp.eq.s32.totalorder %s17, 19
      %p171 = por %p169, %p170
      %p172 = scmp.ne.s32.totalorder %s164, %s167
      %p173 = scmp.eq.s32.totalorder %s17, 0
      %p174 = por %p172, %p173
      %p175 = scmp.ne.s32.totalorder %s164, %s167
      %p176 = scmp.eq.s32.totalorder %s22, 19
      %p177 = por %p175, %p176
      %p178 = scmp.ne.s32.totalorder %s167, %s168
      %p179 = scmp.eq.s32.totalorder %s22, 0
      %p180 = por %p178, %p179
      %p181 = scmp.ne.s32.totalorder %s167, %s168
      %p182 = scmp.eq.s32.totalorder %s23, 19
      %p183 = por %p181, %p182
      %p185 = scmp.ne.s32.totalorder %s168, %s184
      %p186 = scmp.eq.s32.totalorder %s23, 0
      %p187 = por %p185, %p186
      %p188 = scmp.le.s32.totalorder 1, %s17
      %p189 = scmp.lt.s32.totalorder %s17, 21
      %p190 = pnand %p188, %p189
      %p191 = pneg %p190
      // Predicated region
      $region9: #{fmoe_forward.1} parent=5 // pred_check
        _
      $region10: #{fmoe_forward.1} parent=5 // pred_check_branch
        %193 = sbr.rel (%p190) target = $region12
      $region11: #{fmoe_forward.1} parent=5 // pred_region
        %s194 = ssub.s32 %s17, 1
      $region12: #{fmoe_forward.1} parent=5 // pred_fallthru
        _
      %p195 = scmp.lt.s32.totalorder %s17, 20
      // Predicated region
      $region13: #{fmoe_forward.1} parent=5 // pred_check
        %p196 = pneg %p195
      $region14: #{fmoe_forward.1} parent=5 // pred_check_branch
        %198 = sbr.rel (%p196) target = $region16
      $region15: #{fmoe_forward.1} parent=5 // pred_region
        // Predicated region
        $region17: #{fmoe_forward.1} parent=15 // pred_check
          %p199 = pneg %p58
        $region18: #{fmoe_forward.1} parent=15 // pred_check_branch
          %201 = sbr.rel (%p199) target = $region20
        $region19: #{fmoe_forward.1} parent=15 // pred_region
          %s202 = sand.u32 %s48, 1
          %s203 = sand.u32 %s48, 1
          %s204 = smul.addr %s203, 16
          %s205 = scalar_lea.vmem [#allocation5], %s204
          %s206 = smul.u32 4, %s24
          %s207 = smul.addr %s206, 2
          %s208 = sadd.s32 %s26, %s207
          %s209 = smul.addr %s208, 4
          %s210 = scalar_lea.vmem %s1, %s209
          // Predicated region
          $region21: #{fmoe_forward.1} parent=19 // pred_check
            _
          $region22: #{fmoe_forward.1} parent=19 // pred_check_branch
            %212 = sbr.rel (0) target = $region24
          $region23: #{fmoe_forward.1} parent=19 // pred_region
            // Predicated region
            $region25: #{fmoe_forward.1} parent=23 // pred_check
              _
            $region26: #{fmoe_forward.1} parent=23 // pred_check_branch
              %214 = sbr.rel target = $region28
            $region27: #{fmoe_forward.1} parent=23 // pred_region
              // Predicated region
              $region40: #{fmoe_forward.1} parent=27 // pred_check
                _
              $region41: #{fmoe_forward.1} parent=27 // pred_check_branch
                %235 = sbr.rel (0) target = $region43
              $region42: #{fmoe_forward.1} parent=27 // pred_region
                loop: start=0, step=1, limit=1
                $region44: #{fmoe_forward.1} parent=42 // loop_pre_header
                  _
                $region45: #{fmoe_forward.1} parent=42 // loop_header
                  %s237 = sphi 0, %s241
                  %p238 = scmp.ge.s32.totalorder %s237, 1
                  %s242 = sphi %s210, %s210
                  %s243 = sphi %s205, %s205
                $region46: #{fmoe_forward.1} parent=42 // loop_header_branch
                  %240 = sbr.rel (%p238) target = $region50
                $region47: #{fmoe_forward.1} parent=42 // loop_body
                  _
                $region48: #{fmoe_forward.1} parent=42 // loop_footer
                  %s241 = sadd.s32 1, %s237
                $region49: #{fmoe_forward.1} parent=42 // loop_footer_branch
                  %236 = sbr.rel target = $region45
                $region50: #{fmoe_forward.1} parent=42 // loop_exit
                  _
                loop: start=0, step=1, limit=1
                $region51: #{fmoe_forward.1} parent=42 // loop_pre_header
                  _
                $region52: #{fmoe_forward.1} parent=42 // loop_header
                  %s246 = sphi 0, %s250
                  %p247 = scmp.ge.s32.totalorder %s246, 1
                  %s251 = sphi %s210, %s210
                  %s252 = sphi %s205, %s205
                $region53: #{fmoe_forward.1} parent=42 // loop_header_branch
                  %249 = sbr.rel (%p247) target = $region57
                $region54: #{fmoe_forward.1} parent=42 // loop_body
                  %v253 = vld [vmem:[%s251] sm:$0xf]
                  %254 = vst [vmem:[%s252] sm:$0xf] %v253
                  %v255 = vld [vmem:[%s251 + $0x8] sm:$0xf]
                  %256 = vst [vmem:[%s252 + $0x4] sm:$0xf] %v255
                  %v257 = vld [vmem:[%s251 + $0x10] sm:$0xf]
                  %258 = vst [vmem:[%s252 + $0x8] sm:$0xf] %v257
                  %v259 = vld [vmem:[%s251 + $0x18] sm:$0xf]
                  %260 = vst [vmem:[%s252 + $0xc] sm:$0xf] %v259
                $region55: #{fmoe_forward.1} parent=42 // loop_footer
                  %s250 = sadd.s32 1, %s246
                $region56: #{fmoe_forward.1} parent=42 // loop_footer_branch
                  %245 = sbr.rel target = $region52
                $region57: #{fmoe_forward.1} parent=42 // loop_exit
                  _
              $region43: #{fmoe_forward.1} parent=27 // pred_fallthru
                _
            $region28: #{fmoe_forward.1} parent=23 // pred_fallthru
              _
            // Predicated region
            $region29: #{fmoe_forward.1} parent=23 // pred_check
              _
            $region30: #{fmoe_forward.1} parent=23 // pred_check_branch
              %216 = sbr.rel (0) target = $region32
            $region31: #{fmoe_forward.1} parent=23 // pred_region
              loop: start=0, step=1, limit=1
              $region33: #{fmoe_forward.1} parent=31 // loop_pre_header
                _
              $region34: #{fmoe_forward.1} parent=31 // loop_header
                %s219 = sphi 0, %s223
                %p220 = scmp.ge.s32.totalorder %s219, 1
                %s224 = sphi %s210, %s210
                %s225 = sphi %s205, %s205
              $region35: #{fmoe_forward.1} parent=31 // loop_header_branch
                %222 = sbr.rel (%p220) target = $region39
              $region36: #{fmoe_forward.1} parent=31 // loop_body
                %v226 = vld [vmem:[%s224] sm:$0xf]
                %227 = vst [vmem:[%s225] sm:$0xf] %v226
                %v228 = vld [vmem:[%s224 + $0x8] sm:$0xf]
                %229 = vst [vmem:[%s225 + $0x4] sm:$0xf] %v228
                %v230 = vld [vmem:[%s224 + $0x10] sm:$0xf]
                %231 = vst [vmem:[%s225 + $0x8] sm:$0xf] %v230
                %v232 = vld [vmem:[%s224 + $0x18] sm:$0xf]
                %233 = vst [vmem:[%s225 + $0xc] sm:$0xf] %v232
              $region37: #{fmoe_forward.1} parent=31 // loop_footer
                %s223 = sadd.s32 1, %s219
              $region38: #{fmoe_forward.1} parent=31 // loop_footer_branch
                %218 = sbr.rel target = $region34
              $region39: #{fmoe_forward.1} parent=31 // loop_exit
                _
            $region32: #{fmoe_forward.1} parent=23 // pred_fallthru
              _
          $region24: #{fmoe_forward.1} parent=19 // pred_fallthru
            _
          %261 = vnop
        $region20: #{fmoe_forward.1} parent=15 // pred_fallthru
          _
        // Predicated region
        $region58: #{fmoe_forward.1} parent=15 // pred_check
          %p262 = pneg %p90
        $region59: #{fmoe_forward.1} parent=15 // pred_check_branch
          %264 = sbr.rel (%p262) target = $region61
        $region60: #{fmoe_forward.1} parent=15 // pred_region
          %s265 = sand.u32 %s80, 1
          %s266 = sand.u32 %s80, 1
          %s267 = smul.addr %s266, 64
          %s268 = scalar_lea.vmem [#allocation6], %s267
          %s269 = sld [smem:[#allocation4 + %s24]]
          %s270 = smul.u32 16, %s26
          %s271 = smul.addr %s270, 2
          %s272 = sadd.s32 %s25, %s271
          %s273 = smul.addr %s269, 64
          %s274 = sadd.s32 %s272, %s273
          %s275 = smul.addr %s274, 4
          %s276 = scalar_lea.vmem %s2, %s275
          // Predicated region
          $region62: #{fmoe_forward.1} parent=60 // pred_check
            _
          $region63: #{fmoe_forward.1} parent=60 // pred_check_branch
            %278 = sbr.rel (0) target = $region65
          $region64: #{fmoe_forward.1} parent=60 // pred_region
            // Predicated region
            $region66: #{fmoe_forward.1} parent=64 // pred_check
              _
            $region67: #{fmoe_forward.1} parent=64 // pred_check_branch
              %280 = sbr.rel target = $region69
            $region68: #{fmoe_forward.1} parent=64 // pred_region
              // Predicated region
              $region81: #{fmoe_forward.1} parent=68 // pred_check
                _
              $region82: #{fmoe_forward.1} parent=68 // pred_check_branch
                %325 = sbr.rel (0) target = $region84
              $region83: #{fmoe_forward.1} parent=68 // pred_region
                loop: start=0, step=1, limit=1
                $region85: #{fmoe_forward.1} parent=83 // loop_pre_header
                  _
                $region86: #{fmoe_forward.1} parent=83 // loop_header
                  %s327 = sphi 0, %s331
                  %p328 = scmp.ge.s32.totalorder %s327, 1
                  %s332 = sphi %s276, %s276
                  %s333 = sphi %s268, %s268
                $region87: #{fmoe_forward.1} parent=83 // loop_header_branch
                  %330 = sbr.rel (%p328) target = $region91
                $region88: #{fmoe_forward.1} parent=83 // loop_body
                  _
                $region89: #{fmoe_forward.1} parent=83 // loop_footer
                  %s331 = sadd.s32 1, %s327
                $region90: #{fmoe_forward.1} parent=83 // loop_footer_branch
                  %326 = sbr.rel target = $region86
                $region91: #{fmoe_forward.1} parent=83 // loop_exit
                  _
                loop: start=0, step=1, limit=1
                $region92: #{fmoe_forward.1} parent=83 // loop_pre_header
                  _
                $region93: #{fmoe_forward.1} parent=83 // loop_header
                  %s336 = sphi 0, %s340
                  %p337 = scmp.ge.s32.totalorder %s336, 1
                  %s341 = sphi %s276, %s276
                  %s342 = sphi %s268, %s268
                $region94: #{fmoe_forward.1} parent=83 // loop_header_branch
                  %339 = sbr.rel (%p337) target = $region98
                $region95: #{fmoe_forward.1} parent=83 // loop_body
                  %v343 = vld [vmem:[%s341] sm:$0xf]
                  %344 = vst [vmem:[%s342] sm:$0xf] %v343
                  %v345 = vld [vmem:[%s341 + $0x8] sm:$0xf]
                  %346 = vst [vmem:[%s342 + $0x4] sm:$0xf] %v345
                  %v347 = vld [vmem:[%s341 + $0x10] sm:$0xf]
                  %348 = vst [vmem:[%s342 + $0x8] sm:$0xf] %v347
                  %v349 = vld [vmem:[%s341 + $0x18] sm:$0xf]
                  %350 = vst [vmem:[%s342 + $0xc] sm:$0xf] %v349
                  %v351 = vld [vmem:[%s341 + $0x20] sm:$0xf]
                  %352 = vst [vmem:[%s342 + $0x10] sm:$0xf] %v351
                  %v353 = vld [vmem:[%s341 + $0x28] sm:$0xf]
                  %354 = vst [vmem:[%s342 + $0x14] sm:$0xf] %v353
                  %v355 = vld [vmem:[%s341 + $0x30] sm:$0xf]
                  %356 = vst [vmem:[%s342 + $0x18] sm:$0xf] %v355
                  %v357 = vld [vmem:[%s341 + $0x38] sm:$0xf]
                  %358 = vst [vmem:[%s342 + $0x1c] sm:$0xf] %v357
                  %v359 = vld [vmem:[%s341 + $0x40] sm:$0xf]
                  %360 = vst [vmem:[%s342 + $0x20] sm:$0xf] %v359
                  %v361 = vld [vmem:[%s341 + $0x48] sm:$0xf]
                  %362 = vst [vmem:[%s342 + $0x24] sm:$0xf] %v361
                  %v363 = vld [vmem:[%s341 + $0x50] sm:$0xf]
                  %364 = vst [vmem:[%s342 + $0x28] sm:$0xf] %v363
                  %v365 = vld [vmem:[%s341 + $0x58] sm:$0xf]
                  %366 = vst [vmem:[%s342 + $0x2c] sm:$0xf] %v365
                  %v367 = vld [vmem:[%s341 + $0x60] sm:$0xf]
                  %368 = vst [vmem:[%s342 + $0x30] sm:$0xf] %v367
                  %v369 = vld [vmem:[%s341 + $0x68] sm:$0xf]
                  %370 = vst [vmem:[%s342 + $0x34] sm:$0xf] %v369
                  %v371 = vld [vmem:[%s341 + $0x70] sm:$0xf]
                  %372 = vst [vmem:[%s342 + $0x38] sm:$0xf] %v371
                  %v373 = vld [vmem:[%s341 + $0x78] sm:$0xf]
                  %374 = vst [vmem:[%s342 + $0x3c] sm:$0xf] %v373
                $region96: #{fmoe_forward.1} parent=83 // loop_footer
                  %s340 = sadd.s32 1, %s336
                $region97: #{fmoe_forward.1} parent=83 // loop_footer_branch
                  %335 = sbr.rel target = $region93
                $region98: #{fmoe_forward.1} parent=83 // loop_exit
                  _
              $region84: #{fmoe_forward.1} parent=68 // pred_fallthru
                _
            $region69: #{fmoe_forward.1} parent=64 // pred_fallthru
              _
            // Predicated region
            $region70: #{fmoe_forward.1} parent=64 // pred_check
              _
            $region71: #{fmoe_forward.1} parent=64 // pred_check_branch
              %282 = sbr.rel (0) target = $region73
            $region72: #{fmoe_forward.1} parent=64 // pred_region
              loop: start=0, step=1, limit=1
              $region74: #{fmoe_forward.1} parent=72 // loop_pre_header
                _
              $region75: #{fmoe_forward.1} parent=72 // loop_header
                %s285 = sphi 0, %s289
                %p286 = scmp.ge.s32.totalorder %s285, 1
                %s290 = sphi %s276, %s276
                %s291 = sphi %s268, %s268
              $region76: #{fmoe_forward.1} parent=72 // loop_header_branch
                %288 = sbr.rel (%p286) target = $region80
              $region77: #{fmoe_forward.1} parent=72 // loop_body
                %v292 = vld [vmem:[%s290] sm:$0xf]
                %293 = vst [vmem:[%s291] sm:$0xf] %v292
                %v294 = vld [vmem:[%s290 + $0x8] sm:$0xf]
                %295 = vst [vmem:[%s291 + $0x4] sm:$0xf] %v294
                %v296 = vld [vmem:[%s290 + $0x10] sm:$0xf]
                %297 = vst [vmem:[%s291 + $0x8] sm:$0xf] %v296
                %v298 = vld [vmem:[%s290 + $0x18] sm:$0xf]
                %299 = vst [vmem:[%s291 + $0xc] sm:$0xf] %v298
                %v300 = vld [vmem:[%s290 + $0x20] sm:$0xf]
                %301 = vst [vmem:[%s291 + $0x10] sm:$0xf] %v300
                %v302 = vld [vmem:[%s290 + $0x28] sm:$0xf]
                %303 = vst [vmem:[%s291 + $0x14] sm:$0xf] %v302
                %v304 = vld [vmem:[%s290 + $0x30] sm:$0xf]
                %305 = vst [vmem:[%s291 + $0x18] sm:$0xf] %v304
                %v306 = vld [vmem:[%s290 + $0x38] sm:$0xf]
                %307 = vst [vmem:[%s291 + $0x1c] sm:$0xf] %v306
                %v308 = vld [vmem:[%s290 + $0x40] sm:$0xf]
                %309 = vst [vmem:[%s291 + $0x20] sm:$0xf] %v308
                %v310 = vld [vmem:[%s290 + $0x48] sm:$0xf]
                %311 = vst [vmem:[%s291 + $0x24] sm:$0xf] %v310
                %v312 = vld [vmem:[%s290 + $0x50] sm:$0xf]
                %313 = vst [vmem:[%s291 + $0x28] sm:$0xf] %v312
                %v314 = vld [vmem:[%s290 + $0x58] sm:$0xf]
                %315 = vst [vmem:[%s291 + $0x2c] sm:$0xf] %v314
                %v316 = vld [vmem:[%s290 + $0x60] sm:$0xf]
                %317 = vst [vmem:[%s291 + $0x30] sm:$0xf] %v316
                %v318 = vld [vmem:[%s290 + $0x68] sm:$0xf]
                %319 = vst [vmem:[%s291 + $0x34] sm:$0xf] %v318
                %v320 = vld [vmem:[%s290 + $0x70] sm:$0xf]
                %321 = vst [vmem:[%s291 + $0x38] sm:$0xf] %v320
                %v322 = vld [vmem:[%s290 + $0x78] sm:$0xf]
                %323 = vst [vmem:[%s291 + $0x3c] sm:$0xf] %v322
              $region78: #{fmoe_forward.1} parent=72 // loop_footer
                %s289 = sadd.s32 1, %s285
              $region79: #{fmoe_forward.1} parent=72 // loop_footer_branch
                %284 = sbr.rel target = $region75
              $region80: #{fmoe_forward.1} parent=72 // loop_exit
                _
            $region73: #{fmoe_forward.1} parent=64 // pred_fallthru
              _
          $region65: #{fmoe_forward.1} parent=60 // pred_fallthru
            _
          %375 = vnop
        $region61: #{fmoe_forward.1} parent=15 // pred_fallthru
          _
        // Predicated region
        $region99: #{fmoe_forward.1} parent=15 // pred_check
          %p376 = pneg %p120
        $region100: #{fmoe_forward.1} parent=15 // pred_check_branch
          %378 = sbr.rel (%p376) target = $region102
        $region101: #{fmoe_forward.1} parent=15 // pred_region
          %s379 = sld [smem:[#allocation4 + %s24]]
          %p380 = scmp.lt.s32.totalorder %s379, 3
          %s381 = scalar_select %p380, %s379, 3
          %p382 = scmp.lt.s32.totalorder %s25, 1
          %s383 = scalar_select %p382, %s25, 1
          %s384 = smul.addr %s381, 2
          %s385 = sadd.s32 %s383, %s384
          %s386 = scalar_lea.vmem %s3, %s385
          %s387 = sld [smem:[#allocation4 + %s24]]
        $region102: #{fmoe_forward.1} parent=15 // pred_fallthru
          _
        // Predicated region
        $region103: #{fmoe_forward.1} parent=15 // pred_check
          %p388 = pneg %p146
        $region104: #{fmoe_forward.1} parent=15 // pred_check_branch
          %390 = sbr.rel (%p388) target = $region106
        $region105: #{fmoe_forward.1} parent=15 // pred_region
          %s391 = smul.u32 4, %s24
          %p392 = scmp.lt.s32.totalorder %s391, 19
          %s393 = scalar_select %p392, %s391, 19
          %s394 = smul.addr %s393, 8
          %s395 = scalar_lea.vmem %s4, %s394
          %s396 = smul.u32 4, %s24
        $region106: #{fmoe_forward.1} parent=15 // pred_fallthru
          _
      $region16: #{fmoe_forward.1} parent=5 // pred_fallthru
        _
      %p397 = scmp.le.s32.totalorder 1, %s17
      %p398 = scmp.lt.s32.totalorder %s17, 21
      %p399 = pnand %p397, %p398
      %p400 = pneg %p399
      // Predicated region
      $region107: #{fmoe_forward.1} parent=5 // pred_check
        _
      $region108: #{fmoe_forward.1} parent=5 // pred_check_branch
        %402 = sbr.rel (%p399) target = $region110
      $region109: #{fmoe_forward.1} parent=5 // pred_region
        %s403 = ssub.s32 %s17, 1
        %s404 = sand.u32 %s51, 1
        %s405 = sand.u32 %s51, 1
        %s406 = smul.addr %s405, 16
        %s407 = scalar_lea.vmem [#allocation5], %s406
        // Predicated region
        $region111: #{fmoe_forward.1} parent=109 // pred_check
          %p408 = pneg %p64
        $region112: #{fmoe_forward.1} parent=109 // pred_check_branch
          %410 = sbr.rel (%p408) target = $region114
        $region113: #{fmoe_forward.1} parent=109 // pred_region
          _
        $region114: #{fmoe_forward.1} parent=109 // pred_fallthru
          _
        %s411 = sand.u32 %s83, 1
        %s412 = sand.u32 %s83, 1
        %s413 = smul.addr %s412, 64
        %s414 = scalar_lea.vmem [#allocation6], %s413
        // Predicated region
        $region115: #{fmoe_forward.1} parent=109 // pred_check
          %p415 = pneg %p96
        $region116: #{fmoe_forward.1} parent=109 // pred_check_branch
          %417 = sbr.rel (%p415) target = $region118
        $region117: #{fmoe_forward.1} parent=109 // pred_region
          _
        $region118: #{fmoe_forward.1} parent=109 // pred_fallthru
          _
        %s418 = sand.u32 %s51, 1
        %s419 = sand.u32 %s51, 1
        %s420 = smul.addr %s419, 16
        %s421 = scalar_lea.vmem [#allocation5], %s420
        %p422 = pneg %p64
        %p423 = pneg %p61
        %s424 = sand.u32 %s83, 1
        %s425 = sand.u32 %s83, 1
        %s426 = smul.addr %s425, 64
        %s427 = scalar_lea.vmem [#allocation6], %s426
        %p428 = pneg %p96
        %p429 = pneg %p93
        %s430 = sld [smem:[#allocation4 + %s27]]
        %p431 = scmp.lt.s32.totalorder %s430, 3
        %s432 = scalar_select %p431, %s430, 3
        %p433 = scmp.lt.s32.totalorder %s28, 1
        %s434 = scalar_select %p433, %s28, 1
        %s435 = smul.addr %s432, 2
        %s436 = sadd.s32 %s434, %s435
        %s437 = scalar_lea.vmem %s3, %s436
        %p438 = pneg %p126
        %p439 = pneg %p123
        %s440 = smul.u32 4, %s27
        %p441 = scmp.lt.s32.totalorder %s440, 19
        %s442 = scalar_select %p441, %s440, 19
        %s443 = smul.addr %s442, 8
        %s444 = scalar_lea.vmem %s4, %s443
        %p445 = pneg %p152
        %p446 = pneg %p149
        %p447 = pneg %p180
        %p448 = pneg %p177
        %s449 = sand.u32 %s167, 1
        %s450 = sand.u32 %s167, 1
        %s451 = smul.addr %s450, 32
        %s452 = scalar_lea.vmem [#allocation7], %s451
        %s453 = smul.u32 4, %s27
        %s454 = sld [smem:[#allocation4 + %s27]]
        %s455 = smul.u32 16, %s29
        %s456 = sld [smem:[#allocation4 + %s27]]
        %p457 = scmp.lt.s32.totalorder %s456, 3
        %s458 = scalar_select %p457, %s456, 3
        %p459 = scmp.lt.s32.totalorder %s28, 1
        %s460 = scalar_select %p459, %s28, 1
        %s461 = smul.addr %s458, 2
        %s462 = sadd.s32 %s460, %s461
        %s463 = scalar_lea.vmem %s3, %s462
        %s464 = sld [smem:[#allocation4 + %s27]]
        %s465 = smul.u32 4, %s27
        %p466 = scmp.lt.s32.totalorder %s465, 19
        %s467 = scalar_select %p466, %s465, 19
        %s468 = smul.addr %s467, 8
        %s469 = scalar_lea.vmem %s4, %s468
        %s470 = smul.u32 4, %s27
        %s471 = smul.u32 4, %s27
        %p473 = scmp.eq.s32.totalorder %s29, 0
        // Predicated region
        $region119: #{fmoe_forward.1} parent=109 // pred_check
          %p474 = pneg %p473
        $region120: #{fmoe_forward.1} parent=109 // pred_check_branch
          %476 = sbr.rel (%p474) target = $region122
        $region121: #{fmoe_forward.1} parent=109 // pred_region
          %v477 = vld [vmem:[%s463] sm:$0x1]
          %v479 = vlaneseq
          %v480 = vshrl.u32 %v479, 7
          %v481 = vsub.s32 0, %v480
          %v482 = vrot.slane %v477, %v481
          %484 = vst [vmem:[#allocation2] sm:$0xff] %v482
          %485 = vst [vmem:[#allocation2 + $0x8] sm:$0xff] %v482
          %486 = vst [vmem:[#allocation2 + $0x10] sm:$0xff] %v482
          %487 = vst [vmem:[#allocation2 + $0x18] sm:$0xff] %v482
        $region122: #{fmoe_forward.1} parent=109 // pred_fallthru
          _
        %v488 = vld [vmem:[#allocation2] sm:$0xff]
        %v489 = vld [vmem:[#allocation2 + $0x8] sm:$0xff]
        %v490 = vld [vmem:[#allocation2 + $0x10] sm:$0xff]
        %v491 = vld [vmem:[#allocation2 + $0x18] sm:$0xff]
        %v492 = vld [vmem:[%s407] sm:$0xf]
        %v493 = vld [vmem:[%s407 + $0x4] sm:$0xf]
        %v494 = vld [vmem:[%s407 + $0x8] sm:$0xf]
        %v495 = vld [vmem:[%s407 + $0xc] sm:$0xf]
        %v496 = vld [vmem:[%s414] sm:$0xf]
        %v497 = vld [vmem:[%s414 + $0x4] sm:$0xf]
        %v498 = vld [vmem:[%s414 + $0x8] sm:$0xf]
        %v499 = vld [vmem:[%s414 + $0xc] sm:$0xf]
        %v500 = vld [vmem:[%s414 + $0x10] sm:$0xf]
        %v501 = vld [vmem:[%s414 + $0x14] sm:$0xf]
        %v502 = vld [vmem:[%s414 + $0x18] sm:$0xf]
        %v503 = vld [vmem:[%s414 + $0x1c] sm:$0xf]
        %v504 = vld [vmem:[%s414 + $0x20] sm:$0xf]
        %v505 = vld [vmem:[%s414 + $0x24] sm:$0xf]
        %v506 = vld [vmem:[%s414 + $0x28] sm:$0xf]
        %v507 = vld [vmem:[%s414 + $0x2c] sm:$0xf]
        %v508 = vld [vmem:[%s414 + $0x30] sm:$0xf]
        %v509 = vld [vmem:[%s414 + $0x34] sm:$0xf]
        %v510 = vld [vmem:[%s414 + $0x38] sm:$0xf]
        %v511 = vld [vmem:[%s414 + $0x3c] sm:$0xf]
        %v516 = vunpack.c.l.b16 %v492
        %v517 = vunpack.c.l.b16 %v493
        %v518 = vunpack.c.l.b16 %v494
        %v519 = vunpack.c.l.b16 %v495
        %v520 = vpack.c.b16 %v517, %v516
        %v521 = vpack.c.b16 %v519, %v518
        %v540 = vunpack.c.l.b16 %v496
        %v541 = vunpack.c.l.b16 %v497
        %v542 = vunpack.c.l.b16 %v498
        %v543 = vunpack.c.l.b16 %v499
        %v544 = vunpack.c.l.b16 %v500
        %v545 = vunpack.c.l.b16 %v501
        %v546 = vunpack.c.l.b16 %v502
        %v547 = vunpack.c.l.b16 %v503
        %v548 = vunpack.c.l.b16 %v504
        %v549 = vunpack.c.l.b16 %v505
        %v550 = vunpack.c.l.b16 %v506
        %v551 = vunpack.c.l.b16 %v507
        %v552 = vunpack.c.l.b16 %v508
        %v553 = vunpack.c.l.b16 %v509
        %v554 = vunpack.c.l.b16 %v510
        %v555 = vunpack.c.l.b16 %v511
        %v556 = vpack.c.b16 %v541, %v540
        %v557 = vpack.c.b16 %v543, %v542
        %v558 = vpack.c.b16 %v545, %v544
        %v559 = vpack.c.b16 %v547, %v546
        %v560 = vpack.c.b16 %v549, %v548
        %v561 = vpack.c.b16 %v551, %v550
        %v562 = vpack.c.b16 %v553, %v552
        %v563 = vpack.c.b16 %v555, %v554
        %572 = vmatprep.subr.bf16.mxu0 0
        %573 = vmatpush1.bf16.msra.mxu0 %v556
        %574 = vmatprep.subr.bf16.mxu0 0
        %575 = vmatpush1.bf16.msra.mxu0 %v557
        %576 = vmatprep.subr.bf16.mxu0 0
        %577 = vmatpush1.bf16.msra.mxu0 %v558
        %578 = vmatprep.subr.bf16.mxu0 0
        %579 = vmatpush1.bf16.msra.mxu0 %v559
        %580 = vmatprep.subr.bf16.mxu0 0
        %581 = vmatpush1.bf16.msra.mxu0 %v560
        %582 = vmatprep.subr.bf16.mxu0 0
        %583 = vmatpush1.bf16.msra.mxu0 %v561
        %584 = vmatprep.subr.bf16.mxu0 0
        %585 = vmatpush1.bf16.msra.mxu0 %v562
        %586 = vmatprep.subr.bf16.mxu0 0
        %587 = vmatpush1.bf16.msra.mxu0 %v563
        %588 = vmatprep.subr.bf16.mxu0 0
        %589 = vmatpush1.bf16.msra.mxu0 0
        %590 = vmatprep.subr.bf16.mxu0 0
        %591 = vmatpush1.bf16.msra.mxu0 0
        %592 = vmatprep.subr.bf16.mxu0 0
        %593 = vmatpush1.bf16.msra.mxu0 0
        %594 = vmatprep.subr.bf16.mxu0 0
        %595 = vmatpush1.bf16.msra.mxu0 0
        %596 = vmatprep.subr.bf16.mxu0 0
        %597 = vmatpush1.bf16.msra.mxu0 0
        %598 = vmatprep.subr.bf16.mxu0 0
        %599 = vmatpush1.bf16.msra.mxu0 0
        %600 = vmatprep.subr.bf16.mxu0 0
        %601 = vmatpush1.bf16.msra.mxu0 0
        %602 = vmatprep.subr.bf16.mxu0 0
        %603 = vmatpush1.bf16.msra.mxu0 0
        %604 = vmatprep.mubr.bf16.mxu0 0
        %605 = vmatmul.mubr.bf16.gmra.mrb[0].mxu0 %v520
        %v606 = vpop.f32.mrb[0].mxu0
        %v607 = vadd.f32 0.0, %v606
        %v608 = vpop.f32.mrb[0].mxu0
        %v609 = vpop.f32.mrb[0].mxu0
        %v610 = vadd.f32 0.0, %v609
        %v611 = vpop.f32.mrb[0].mxu0
        %612 = vmatprep.mubr.bf16.mxu0 0
        %613 = vmatmul.mubr.bf16.gmra.mrb[0].mxu0 %v521
        %v614 = vpop.f32.mrb[0].mxu0
        %v615 = vadd.f32 0.0, %v614
        %v616 = vpop.f32.mrb[0].mxu0
        %v617 = vpop.f32.mrb[0].mxu0
        %v618 = vadd.f32 0.0, %v617
        %v619 = vpop.f32.mrb[0].mxu0
        %620 = vdwg.mxu0
        %v621 = vadd.f32 %v488, %v607
        %v622 = vadd.f32 %v489, %v610
        %v623 = vadd.f32 %v490, %v615
        %v624 = vadd.f32 %v491, %v618
        %625 = vst [vmem:[#allocation2] sm:$0xff] %v621
        %626 = vst [vmem:[#allocation2 + $0x8] sm:$0xff] %v622
        %627 = vst [vmem:[#allocation2 + $0x10] sm:$0xff] %v623
        %628 = vst [vmem:[#allocation2 + $0x18] sm:$0xff] %v624
        %p629 = scmp.eq.s32.totalorder %s29, 1
        // Predicated region
        $region123: #{fmoe_forward.1} parent=109 // pred_check
          %p630 = pneg %p629
        $region124: #{fmoe_forward.1} parent=109 // pred_check_branch
          %632 = sbr.rel (%p630) target = $region126
        $region125: #{fmoe_forward.1} parent=109 // pred_region
          %v633 = vld [vmem:[#allocation2] sm:$0xff]
          %v634 = vld [vmem:[#allocation2 + $0x8] sm:$0xff]
          %v635 = vld [vmem:[#allocation2 + $0x10] sm:$0xff]
          %v636 = vld [vmem:[#allocation2 + $0x18] sm:$0xff]
          %v637 = vld [vmem:[%s469] sm:$0xff]
          %v638 = vld [vmem:[%s469 + $0x8] sm:$0xff]
          %v639 = vld [vmem:[%s469 + $0x10] sm:$0xff]
          %v640 = vld [vmem:[%s469 + $0x18] sm:$0xff]
          %642 = vset.pattern.permute.xlu0 0
          %643 = vperm.xlu0 %642, %v637
          %v644 = vpop.permute.xlu0 %643
          %647 = vset.pattern.permute.xlu0 0
          %648 = vperm.xlu0 %647, %v638
          %v649 = vpop.permute.xlu0 %648
          %652 = vset.pattern.permute.xlu0 0
          %653 = vperm.xlu0 %652, %v639
          %v654 = vpop.permute.xlu0 %653
          %657 = vset.pattern.permute.xlu0 0
          %658 = vperm.xlu0 %657, %v640
          %v659 = vpop.permute.xlu0 %658
          %v661 = vmul.f32 %v633, %v644
          %v662 = vmul.f32 %v634, %v649
          %v663 = vmul.f32 %v635, %v654
          %v664 = vmul.f32 %v636, %v659
          %665 = vst [vmem:[%s452] sm:$0xff] %v661
          %666 = vst [vmem:[%s452 + $0x8] sm:$0xff] %v662
          %667 = vst [vmem:[%s452 + $0x10] sm:$0xff] %v663
          %668 = vst [vmem:[%s452 + $0x18] sm:$0xff] %v664
        $region126: #{fmoe_forward.1} parent=109 // pred_fallthru
          _
        %s669 = sand.u32 %s167, 1
        %s670 = sand.u32 %s167, 1
        %s671 = smul.addr %s670, 32
        %s672 = scalar_lea.vmem [#allocation7], %s671
        // Predicated region
        $region127: #{fmoe_forward.1} parent=109 // pred_check
          %p673 = pneg %p177
        $region128: #{fmoe_forward.1} parent=109 // pred_check_branch
          %675 = sbr.rel (%p673) target = $region130
        $region129: #{fmoe_forward.1} parent=109 // pred_region
          %s676 = smul.u32 4, %s27
          %s677 = smul.addr %s676, 2
          %s678 = sadd.s32 %s28, %s677
          %s679 = smul.addr %s678, 8
          %s680 = scalar_lea.vmem %s5, %s679
          // Predicated region
          $region131: #{fmoe_forward.1} parent=129 // pred_check
            _
          $region132: #{fmoe_forward.1} parent=129 // pred_check_branch
            %682 = sbr.rel (0) target = $region134
          $region133: #{fmoe_forward.1} parent=129 // pred_region
            // Predicated region
            $region135: #{fmoe_forward.1} parent=133 // pred_check
              _
            $region136: #{fmoe_forward.1} parent=133 // pred_check_branch
              %684 = sbr.rel (0) target = $region138
            $region137: #{fmoe_forward.1} parent=133 // pred_region
              // Predicated region
              $region150: #{fmoe_forward.1} parent=137 // pred_check
                _
              $region151: #{fmoe_forward.1} parent=137 // pred_check_branch
                %705 = sbr.rel (0) target = $region153
              $region152: #{fmoe_forward.1} parent=137 // pred_region
                loop: start=0, step=1, limit=1
                $region154: #{fmoe_forward.1} parent=152 // loop_pre_header
                  _
                $region155: #{fmoe_forward.1} parent=152 // loop_header
                  %s707 = sphi 0, %s711
                  %p708 = scmp.ge.s32.totalorder %s707, 1
                  %s712 = sphi %s672, %s672
                  %s713 = sphi %s680, %s680
                $region156: #{fmoe_forward.1} parent=152 // loop_header_branch
                  %710 = sbr.rel (%p708) target = $region160
                $region157: #{fmoe_forward.1} parent=152 // loop_body
                  %v714 = vld [vmem:[%s712] sm:$0xff]
                  %715 = vst [vmem:[%s713] sm:$0xff] %v714
                  %v716 = vld [vmem:[%s712 + $0x8] sm:$0xff]
                  %717 = vst [vmem:[%s713 + $0x10] sm:$0xff] %v716
                  %v718 = vld [vmem:[%s712 + $0x10] sm:$0xff]
                  %719 = vst [vmem:[%s713 + $0x20] sm:$0xff] %v718
                  %v720 = vld [vmem:[%s712 + $0x18] sm:$0xff]
                  %721 = vst [vmem:[%s713 + $0x30] sm:$0xff] %v720
                $region158: #{fmoe_forward.1} parent=152 // loop_footer
                  %s711 = sadd.s32 1, %s707
                $region159: #{fmoe_forward.1} parent=152 // loop_footer_branch
                  %706 = sbr.rel target = $region155
                $region160: #{fmoe_forward.1} parent=152 // loop_exit
                  _
              $region153: #{fmoe_forward.1} parent=137 // pred_fallthru
                _
              // Predicated region
              $region161: #{fmoe_forward.1} parent=137 // pred_check
                _
              $region162: #{fmoe_forward.1} parent=137 // pred_check_branch
                %723 = sbr.rel target = $region164
              $region163: #{fmoe_forward.1} parent=137 // pred_region
                _
              $region164: #{fmoe_forward.1} parent=137 // pred_fallthru
                _
            $region138: #{fmoe_forward.1} parent=133 // pred_fallthru
              _
            // Predicated region
            $region139: #{fmoe_forward.1} parent=133 // pred_check
              _
            $region140: #{fmoe_forward.1} parent=133 // pred_check_branch
              %686 = sbr.rel target = $region142
            $region141: #{fmoe_forward.1} parent=133 // pred_region
              loop: start=0, step=1, limit=1
              $region143: #{fmoe_forward.1} parent=141 // loop_pre_header
                _
              $region144: #{fmoe_forward.1} parent=141 // loop_header
                %s689 = sphi 0, %s693
                %p690 = scmp.ge.s32.totalorder %s689, 1
                %s694 = sphi %s672, %s672
                %s695 = sphi %s680, %s680
              $region145: #{fmoe_forward.1} parent=141 // loop_header_branch
                %692 = sbr.rel (%p690) target = $region149
              $region146: #{fmoe_forward.1} parent=141 // loop_body
                %v696 = vld [vmem:[%s694] sm:$0xff]
                %697 = vst [vmem:[%s695] sm:$0xff] %v696
                %v698 = vld [vmem:[%s694 + $0x8] sm:$0xff]
                %699 = vst [vmem:[%s695 + $0x10] sm:$0xff] %v698
                %v700 = vld [vmem:[%s694 + $0x10] sm:$0xff]
                %701 = vst [vmem:[%s695 + $0x20] sm:$0xff] %v700
                %v702 = vld [vmem:[%s694 + $0x18] sm:$0xff]
                %703 = vst [vmem:[%s695 + $0x30] sm:$0xff] %v702
              $region147: #{fmoe_forward.1} parent=141 // loop_footer
                %s693 = sadd.s32 1, %s689
              $region148: #{fmoe_forward.1} parent=141 // loop_footer_branch
                %688 = sbr.rel target = $region144
              $region149: #{fmoe_forward.1} parent=141 // loop_exit
                _
            $region142: #{fmoe_forward.1} parent=133 // pred_fallthru
              _
          $region134: #{fmoe_forward.1} parent=129 // pred_fallthru
            _
          %724 = vnop
        $region130: #{fmoe_forward.1} parent=109 // pred_fallthru
          _
      $region110: #{fmoe_forward.1} parent=5 // pred_fallthru
        _
      %p725 = scmp.le.s32.totalorder 2, %s17
      // Predicated region
      $region165: #{fmoe_forward.1} parent=5 // pred_check
        %p726 = pneg %p725
      $region166: #{fmoe_forward.1} parent=5 // pred_check_branch
        %728 = sbr.rel (%p726) target = $region168
      $region167: #{fmoe_forward.1} parent=5 // pred_region
        %s729 = ssub.s32 %s17, 2
        // Predicated region
        $region169: #{fmoe_forward.1} parent=167 // pred_check
          %p730 = pneg %p183
        $region170: #{fmoe_forward.1} parent=167 // pred_check_branch
          %732 = sbr.rel (%p730) target = $region172
        $region171: #{fmoe_forward.1} parent=167 // pred_region
          %s733 = sand.u32 %s168, 1
          %s734 = sand.u32 %s168, 1
          %s735 = smul.addr %s734, 32
          %s736 = scalar_lea.vmem [#allocation7], %s735
        $region172: #{fmoe_forward.1} parent=167 // pred_fallthru
          _
      $region168: #{fmoe_forward.1} parent=5 // pred_fallthru
        _
    $region6: #{fmoe_forward.1} parent=1 // loop_footer
      %s21 = sadd.s32 1, %s17
    $region7: #{fmoe_forward.1} parent=1 // loop_footer_branch
      %16 = sbr.rel target = $region3
    $region8: #{fmoe_forward.1} parent=1 // loop_exit
      _

</llo_original>
